<compile_context>
chip_gen: v7x
topology: tpu7x:2x2x1
jax: 0.10.0
libtpu: 0.0.40
codegen_flags: <defaults>
</compile_context>

<pallas_src>
import jax
import jax.numpy as jnp
from jax.experimental import pallas as pl
from jax.experimental.pallas import tpu as pltpu


def _round_up(x, m):
    return ((x + m - 1) // m) * m


def _sublane_align(dtype):
    """Rows packed per vreg sublane group for this dtype."""
    itemsize = jnp.dtype(dtype).itemsize
    if itemsize >= 4:
        return 8
    if itemsize == 2:
        return 16
    return 32


def _teamreg_kernel(obs_ref, w_ref, b_ref, act_ref):
    # MXU matmul in the inputs' native dtype, f32 accumulation;
    # bias add (VALU) + tanh (EUP) epilogue; store only the real act_dim cols.
    logits = jnp.dot(obs_ref[...], w_ref[...],
                     preferred_element_type=jnp.float32)
    logits = logits + b_ref[...]          # (1, act_dim) broadcasts over batch tile
    act_ref[...] = jnp.tanh(logits).astype(act_ref.dtype)


def teamreg_forward(obs, w, b, *, batch_tile=4096):
    """pi(s) = tanh(s @ W + b), fused, batch-tiled Pallas kernel."""
    B, obs_dim = obs.shape
    act_dim = w.shape[1]

    # Single-dtype MXU path (avoid silent mixed-precision promotion).
    if w.dtype != obs.dtype:
        w = w.astype(obs.dtype)
    b2 = jnp.reshape(b, (1, act_dim)).astype(jnp.float32)

    # --- batch tiling: dtype-aware sublane alignment, bounded padding waste,
    #     even step count (>=2) for the v7x two-TensorCore split.
    align = _sublane_align(obs.dtype)
    b_aligned = _round_up(B, align)
    num_steps = max(1, pl.cdiv(b_aligned, batch_tile))
    if num_steps >= 2 and num_steps % 2 == 1:
        num_steps += 1
    tb = _round_up(pl.cdiv(b_aligned, num_steps), align)
    b_padded = tb * num_steps
    if b_padded != B:
        obs = jnp.pad(obs, ((0, b_padded - B), (0, 0)))
    grid = (num_steps,)

    out_dtype = obs.dtype
    itemsize = lambda a: a.size * a.dtype.itemsize
    cost = pl.CostEstimate(
        flops=2 * b_padded * obs_dim * act_dim,
        transcendentals=b_padded * act_dim,
        bytes_accessed=(itemsize(obs) + itemsize(w) + itemsize(b2)
                        + b_padded * act_dim * jnp.dtype(out_dtype).itemsize),
    )

    out = pl.pallas_call(
        _teamreg_kernel,
        out_shape=jax.ShapeDtypeStruct((b_padded, act_dim), out_dtype),
        grid=grid,
        in_specs=[
            # obs: tiled over batch; last dim equals full array dim (legal).
            pl.BlockSpec((tb, obs_dim), lambda i: (i, 0)),
            # W: resident (same block every step).
            pl.BlockSpec((obs_dim, act_dim), lambda i: (0, 0)),
            # bias: resident.
            pl.BlockSpec((1, act_dim), lambda i: (0, 0)),
        ],
        # Output block's last dim equals the full array dim -> legal, and no
        # padded zero columns are ever written back to HBM.
        out_specs=pl.BlockSpec((tb, act_dim), lambda i: (i, 0)),
        compiler_params=pltpu.CompilerParams(
            # Batch tiles are independent -> shard across TensorCores on v7x.
            dimension_semantics=("parallel",),
        ),
        cost_estimate=cost,
    )(obs, w, b2)

    # Strip batch padding outside the kernel.
    return out[:B]


class TeamRegNN:
    """JAX/Pallas counterpart of the (stub) PyTorch TeamRegNN."""

    def __init__(self, obs_dim=32, act_dim=8, key=None):
        if key is None:
            key = jax.random.PRNGKey(0)
        kw, kb = jax.random.split(key)
        # Deterministic synthetic parameters (the torch module declares none).
        self.w = (jax.random.normal(kw, (obs_dim, act_dim), jnp.float32)
                  / jnp.sqrt(jnp.float32(obs_dim)))
        self.b = 0.01 * jax.random.normal(kb, (act_dim,), jnp.float32)

    def forward(self, obs):
        return teamreg_forward(obs, self.w, self.b)

    def calculate_loss(self, **kwargs):
        # TODO(synk): reference calculate_loss is `pass`; nothing to kernelize.
        return None


if __name__ == "__main__":
    key = jax.random.PRNGKey(0)
    k_obs, k_params = jax.random.split(key)

    B, OBS_DIM, ACT_DIM = 8, 32, 8
    obs = jax.random.normal(k_obs, (B, OBS_DIM), jnp.float32)

    model = TeamRegNN(obs_dim=OBS_DIM, act_dim=ACT_DIM, key=k_params)
    actions = model.forward(obs)
    actions = jax.block_until_ready(actions)

    # Sanity check against plain-JAX reference of the same fused computation.
    ref = jnp.tanh(obs @ model.w + model.b)
    assert actions.shape == (B, ACT_DIM)
    assert jnp.allclose(actions, ref, atol=1e-5, rtol=1e-5)

    print("KERNEL_OK")
</pallas_src>

<mosaic_0001>
module attributes {stable_mosaic.version = 11 : i64} {
  func.func @_teamreg_kernel(%arg0: i32, %arg1: memref<8x32xf32, #tpu.memory_space<vmem>>, %arg2: memref<32x8xf32, #tpu.memory_space<vmem>>, %arg3: memref<1x8xf32, #tpu.memory_space<vmem>>, %arg4: memref<8x8xf32, #tpu.memory_space<vmem>>) attributes {dimension_semantics = [#tpu.dimension_semantics<parallel>], iteration_bounds = array<i64: 1>, scalar_prefetch = 0 : i64, scratch_operands = 0 : i64, tpu.core_type = #tpu.core_type<tc>, window_params = [{transform_indices = @transform_0, window_bounds = array<i64: 8, 32>}, {pipeline_mode = #tpu.pipeline_mode<synchronous>, transform_indices = @transform_1, window_bounds = array<i64: 32, 8>}, {pipeline_mode = #tpu.pipeline_mode<synchronous>, transform_indices = @transform_2, window_bounds = array<i64: 1, 8>}, {transform_indices = @transform_3, window_bounds = array<i64: 8, 8>}]} {
    %c0 = arith.constant 0 : index
    %c0_0 = arith.constant 0 : index
    %0 = vector.load %arg1[%c0, %c0_0] : memref<8x32xf32, #tpu.memory_space<vmem>>, vector<8x32xf32>
    %c0_1 = arith.constant 0 : index
    %c0_2 = arith.constant 0 : index
    %1 = vector.load %arg2[%c0_1, %c0_2] : memref<32x8xf32, #tpu.memory_space<vmem>>, vector<32x8xf32>
    %cst = arith.constant dense<0.000000e+00> : vector<8x8xf32>
    %2 = tpu.matmul %0, %1, %cst {dimension_numbers = #tpu.dot_dimension_numbers<[1], [0], [0], [1], [0, 0, 1, 1], [], []>} : vector<8x32xf32>, vector<32x8xf32>, vector<8x8xf32> -> vector<8x8xf32>
    %c0_3 = arith.constant 0 : index
    %c0_4 = arith.constant 0 : index
    %3 = vector.load %arg3[%c0_3, %c0_4] : memref<1x8xf32, #tpu.memory_space<vmem>>, vector<1x8xf32>
    %4 = vector.broadcast %3 : vector<1x8xf32> to vector<8x8xf32>
    %5 = arith.addf %2, %4 : vector<8x8xf32>
    %6 = math.tanh %5 : vector<8x8xf32>
    %c0_5 = arith.constant 0 : index
    %c0_6 = arith.constant 0 : index
    %7 = vector.load %arg4[%c0_5, %c0_6] : memref<8x8xf32, #tpu.memory_space<vmem>>, vector<8x8xf32>
    tpu.vector_store %arg4[%c0_5, %c0_6], %6 {strides = array<i32>} : memref<8x8xf32, #tpu.memory_space<vmem>>, vector<8x8xf32>,
    return
  }
  func.func @transform_0(%arg0: i32) -> (i32, i32) {
    %c0_i32 = arith.constant 0 : i32
    %c0_i32_0 = arith.constant 0 : i32
    return %arg0, %c0_i32 : i32, i32
  }
  func.func @transform_1(%arg0: i32) -> (i32, i32) {
    %c0_i32 = arith.constant 0 : i32
    %c0_i32_0 = arith.constant 0 : i32
    %c0_i32_1 = arith.constant 0 : i32
    return %c0_i32, %c0_i32_0 : i32, i32
  }
  func.func @transform_2(%arg0: i32) -> (i32, i32) {
    %c0_i32 = arith.constant 0 : i32
    %c0_i32_0 = arith.constant 0 : i32
    %c0_i32_1 = arith.constant 0 : i32
    return %c0_i32, %c0_i32_0 : i32, i32
  }
  func.func @transform_3(%arg0: i32) -> (i32, i32) {
    %c0_i32 = arith.constant 0 : i32
    %c0_i32_0 = arith.constant 0 : i32
    return %arg0, %c0_i32 : i32, i32
  }
}

</mosaic_0001>

<llo_original>
// kernel: tpu_custom_call.1
$region0: #{tpu_custom_call.1}
  #allocation0 [shape = 'u32[]', space=smem, size = 0x4, offset = 0x4, fixed_abs, tag = 'smem constant byte address 0x4 - core index']
  #allocation1 [shape = 'u32[144,128]{1,0:T(1,128)}', space=vmem, size = 0x12000, scoped, tag = 'internal scratch']
  %s0 = inlined_call_operand.vmem [shape: f32[8,32], index: 0, kind: input, shape index: {}]
  %s1 = inlined_call_operand.vmem [shape: f32[32,8], index: 1, kind: input, shape index: {}]
  %s2 = inlined_call_operand.vmem [shape: f32[1,8], index: 2, kind: input, shape index: {}]
  %s3 = inlined_call_operand.hbm [shape: f32[8,8], index: 3, kind: output, shape index: {}]
  %s4 = sld [smem:[#allocation0]]
  $region22: #{tpu_custom_call.1} parent=0
    _
  %s6 = ssub.s32 1, %s4
  %s7 = scalar_select 0, %s6, %s4
  $region1: #{tpu_custom_call.1} parent=0
    #allocation2 [shape = 'u8[4096]{0}', space=vmem, size = 0x1000, scoped, tag = 'output window, operand 0, single buffered']
    #allocation3 [shape = 's32[1]{0}', space=sflag, size = 0x4, scoped, tag = 'scoped memory for tpu_custom_call.1']
    %8 = vsyncpa [#allocation3], 0
    // Predicated region
    $region2: #{tpu_custom_call.1} parent=1 // pred_check
      _
    $region3: #{tpu_custom_call.1} parent=1 // pred_check_branch
      %10 = sbr.rel (0) target = $region5
    $region4: #{tpu_custom_call.1} parent=1 // pred_region
      _
    $region5: #{tpu_custom_call.1} parent=1 // pred_fallthru
      _
    // Predicated region
    $region6: #{tpu_custom_call.1} parent=1 // pred_check
      _
    $region7: #{tpu_custom_call.1} parent=1 // pred_check_branch
      %12 = sbr.rel (0) target = $region9
    $region8: #{tpu_custom_call.1} parent=1 // pred_region
      _
    $region9: #{tpu_custom_call.1} parent=1 // pred_fallthru
      _
    // Predicated region
    $region10: #{tpu_custom_call.1} parent=1 // pred_check
      _
    $region11: #{tpu_custom_call.1} parent=1 // pred_check_branch
      %14 = sbr.rel (0) target = $region13
    $region12: #{tpu_custom_call.1} parent=1 // pred_region
      _
    $region13: #{tpu_custom_call.1} parent=1 // pred_fallthru
      _
    %v15 = vld [vmem:[%s0] sm:$0xff]
    %v16 = vld [vmem:[%s1] sm:$0xff]
    %v17 = vld [vmem:[%s1 + $0x8] sm:$0xff]
    %v18 = vld [vmem:[%s1 + $0x10] sm:$0xff]
    %v19 = vld [vmem:[%s1 + $0x18] sm:$0xff]
    %v20 = vld [vmem:[%s2] sm:$0x1]
    %v22 = vlaneseq
    %v23 = vshrl.u32 %v22, 7
    %v24 = vsub.s32 0, %v23
    %v25 = vrot.slane %v20, %v24
    %vm27 = vcmask 261120
    %v29 = vsel %vm27, %v15, 0
    %31 = vmatprep.subr.mxu0 0.0
    %32 = vmatpush1.msra.mxu0 %v16
    %33 = vmatprep.subr.mxu0 0.0
    %34 = vmatpush1.msra.mxu0 %v17
    %35 = vmatprep.subr.mxu0 0.0
    %36 = vmatpush1.msra.mxu0 %v18
    %37 = vmatprep.subr.mxu0 0.0
    %38 = vmatpush1.msra.mxu0 %v19
    %39 = vmatprep.subr.mxu0 0.0
    %40 = vmatpush1.msra.mxu0 0.0
    %41 = vmatprep.subr.mxu0 0.0
    %42 = vmatpush1.msra.mxu0 0.0
    %43 = vmatprep.subr.mxu0 0.0
    %44 = vmatpush1.msra.mxu0 0.0
    %45 = vmatprep.subr.mxu0 0.0
    %46 = vmatpush1.msra.mxu0 0.0
    %47 = vmatprep.subr.mxu0 0.0
    %48 = vmatpush1.msra.mxu0 0.0
    %49 = vmatprep.subr.mxu0 0.0
    %50 = vmatpush1.msra.mxu0 0.0
    %51 = vmatprep.subr.mxu0 0.0
    %52 = vmatpush1.msra.mxu0 0.0
    %53 = vmatprep.subr.mxu0 0.0
    %54 = vmatpush1.msra.mxu0 0.0
    %55 = vmatprep.subr.mxu0 0.0
    %56 = vmatpush1.msra.mxu0 0.0
    %57 = vmatprep.subr.mxu0 0.0
    %58 = vmatpush1.msra.mxu0 0.0
    %59 = vmatprep.subr.mxu0 0.0
    %60 = vmatpush1.msra.mxu0 0.0
    %61 = vmatprep.subr.mxu0 0.0
    %62 = vmatpush1.msra.mxu0 0.0
    %63 = vmatprep.subr.mxu0 0.0
    %64 = vmatpush1.msra.mxu0 0.0
    %65 = vmatprep.subr.mxu0 0.0
    %66 = vmatpush1.msra.mxu0 0.0
    %67 = vmatprep.subr.mxu0 0.0
    %68 = vmatpush1.msra.mxu0 0.0
    %69 = vmatprep.subr.mxu0 0.0
    %70 = vmatpush1.msra.mxu0 0.0
    %71 = vmatprep.subr.mxu0 0.0
    %72 = vmatpush1.msra.mxu0 0.0
    %73 = vmatprep.subr.mxu0 0.0
    %74 = vmatpush1.msra.mxu0 0.0
    %75 = vmatprep.subr.mxu0 0.0
    %76 = vmatpush1.msra.mxu0 0.0
    %77 = vmatprep.subr.mxu0 0.0
    %78 = vmatpush1.msra.mxu0 0.0
    %79 = vmatprep.subr.mxu0 0.0
    %80 = vmatpush1.msra.mxu0 0.0
    %81 = vmatprep.subr.mxu0 0.0
    %82 = vmatpush1.msra.mxu0 0.0
    %83 = vmatprep.subr.mxu0 0.0
    %84 = vmatpush1.msra.mxu0 0.0
    %85 = vmatprep.subr.mxu0 0.0
    %86 = vmatpush1.msra.mxu0 0.0
    %87 = vmatprep.subr.mxu0 0.0
    %88 = vmatpush1.msra.mxu0 0.0
    %89 = vmatprep.subr.mxu0 0.0
    %90 = vmatpush1.msra.mxu0 0.0
    %91 = vmatprep.subr.mxu0 0.0
    %92 = vmatpush1.msra.mxu0 0.0
    %93 = vmatprep.subr.mxu0 0.0
    %94 = vmatpush1.msra.mxu0 0.0
    %95 = vmatprep.mubr.f32.mxu0 0.0
    %96 = vmatmul.mubr.f32.gmra.mrb[0].mxu0 %v29
    %v97 = vpop.f32.mrb[0].mxu0
    %v98 = vadd.f32 %v25, %v97
    %v99 = vpop.f32.mrb[0].mxu0
    %100 = vdwg.mxu0
    %v101 = vtanh.pop %v98
    %vm102 = vcmask 64512
    %103 = vst.msk [vmem:[#allocation2] sm:$0xff] %vm102, %v101
    // Predicated region
    $region14: #{tpu_custom_call.1} parent=1 // pred_check
      _
    $region15: #{tpu_custom_call.1} parent=1 // pred_check_branch
      %105 = sbr.rel (0) target = $region17
    $region16: #{tpu_custom_call.1} parent=1 // pred_region
      %s107 = ssub.s32 128, 128
      %108 = vsyncadd [#allocation3], %s107
      %s110 = sshll.u32 [#allocation2], 4
      %s111 = int_to_ptr.vmem [resolvable:$true] %s110
      %113 = dma.vmem_to_hbm [thread:$0]  %s111, 128, %s3, [#allocation3]
    $region17: #{tpu_custom_call.1} parent=1 // pred_fallthru
      _
    // Predicated region
    $region18: #{tpu_custom_call.1} parent=1 // pred_check
      _
    $region19: #{tpu_custom_call.1} parent=1 // pred_check_branch
      %115 = sbr.rel (0) target = $region21
    $region20: #{tpu_custom_call.1} parent=1 // pred_region
      %116 = dma.done [#allocation3], 128
    $region21: #{tpu_custom_call.1} parent=1 // pred_fallthru
      _
    %117 = vsyncpa [#allocation3], 1

</llo_original>
